<compile_context>
chip_gen: v6e
topology: v6e:2x2x1
jax: 0.10.0
libtpu: 0.0.40
codegen_flags: <defaults>
</compile_context>

<pallas_src>
import functools

import jax
import jax.numpy as jnp
from jax.experimental import pallas as pl
from jax.experimental.pallas import tpu as pltpu


def _round_up(x, m):
    return ((x + m - 1) // m) * m


# -----------------------------------------------------------------------------
# Fused stacked-LSTM kernel: one grid step == one layer.
# -----------------------------------------------------------------------------
def _stacked_lstm_kernel(x_ref, h0_ref, c0_ref, wih_ref, whh_ref, b_ref,
                         h1_ref, c1_ref, inp_scratch, *, hp):
    """One LSTMCell layer per grid step.

    x_ref   : (Bp, Kp)      padded model input (only consumed at layer 0)
    h0_ref  : (Bp, Hp)      this layer's previous hidden state
    c0_ref  : (Bp, Hp)      this layer's previous cell state
    wih_ref : (Kp, 4*Hp)    input->hidden weight, pre-transposed & gate-padded
    whh_ref : (Hp, 4*Hp)    hidden->hidden weight, pre-transposed & gate-padded
    b_ref   : (1, 4*Hp)     pre-summed bias (b_ih + b_hh)
    h1_ref  : (Bp, Hp)      new hidden state (output)
    c1_ref  : (Bp, Hp)      new cell state   (output)
    inp_scratch : VMEM (Bp, Kp) f32 — running layer input, carried across layers
    """
    layer = pl.program_id(0)

    @pl.when(layer == 0)
    def _():
        inp_scratch[...] = x_ref[...].astype(inp_scratch.dtype)

    x_in = inp_scratch[...]
    h = h0_ref[...]
    c = c0_ref[...]
    wih = wih_ref[...]
    whh = whh_ref[...]

    # Two MXU matmuls, f32 accumulation. Operands cast to the (possibly bf16)
    # weight dtype; all gate math below stays in f32.
    gates = (jnp.dot(x_in.astype(wih.dtype), wih, preferred_element_type=jnp.float32)
             + jnp.dot(h.astype(whh.dtype), whh, preferred_element_type=jnp.float32)
             + b_ref[...])

    # Gate slabs are Hp(=multiple of 128)-aligned -> lane-dense slices.
    i_g = jax.nn.sigmoid(gates[:, 0 * hp:1 * hp])
    f_g = jax.nn.sigmoid(gates[:, 1 * hp:2 * hp])
    g_g = jnp.tanh(gates[:, 2 * hp:3 * hp])
    o_g = jax.nn.sigmoid(gates[:, 3 * hp:4 * hp])

    c_new = f_g * c + i_g * g_g
    h_new = o_g * jnp.tanh(c_new)

    h1_ref[...] = h_new.astype(h1_ref.dtype)
    c1_ref[...] = c_new.astype(c1_ref.dtype)

    # This layer's h becomes the next layer's input.
    # TODO(synk): training-mode dropout would be applied here; identity at inference.
    @pl.when(layer + 1 < pl.num_programs(0))
    def _():
        inp_scratch[:, 0:hp] = h_new


# -----------------------------------------------------------------------------
# Parameter init (PyTorch LSTMCell shapes) and one-time packing.
# -----------------------------------------------------------------------------
def init_stacked_lstm_params(key, num_layers, input_size, hidden_size,
                             dtype=jnp.float32):
    """PyTorch LSTMCell-shaped params: U[-1/sqrt(H), 1/sqrt(H)]."""
    params = []
    bound = 1.0 / float(jnp.sqrt(jnp.asarray(hidden_size, jnp.float32)))
    for i in range(num_layers):
        in_sz = input_size if i == 0 else hidden_size
        key, k1, k2, k3, k4 = jax.random.split(key, 5)
        w_ih = jax.random.uniform(k1, (4 * hidden_size, in_sz), dtype, -bound, bound)
        w_hh = jax.random.uniform(k2, (4 * hidden_size, hidden_size), dtype, -bound, bound)
        b_ih = jax.random.uniform(k3, (4 * hidden_size,), dtype, -bound, bound)
        b_hh = jax.random.uniform(k4, (4 * hidden_size,), dtype, -bound, bound)
        params.append((w_ih, w_hh, b_ih, b_hh))
    return params


def pack_stacked_lstm_params(params, input_size, hidden_size,
                             weight_dtype=jnp.float32):
    """One-time packing: pre-transpose, pre-sum biases, pad to aligned tiles.

    Returns stacked tensors:
      w_ih_t : (L, Kp, 4*Hp)   (layer-0 rows [:input_size], others [:H]; rest zero)
      w_hh_t : (L, Hp, 4*Hp)
      bias   : (L, 1, 4*Hp)    b_ih + b_hh (LSTM gates are plain sums, so legal)
    Each gate occupies its own Hp-wide, 128-aligned lane slab.
    """
    L = len(params)
    H = hidden_size
    Hp = _round_up(H, 128)
    Ip = _round_up(input_size, 128)
    Kp = max(Ip, Hp)

    wih_s = jnp.zeros((L, Kp, 4 * Hp), weight_dtype)
    whh_s = jnp.zeros((L, Hp, 4 * Hp), weight_dtype)
    b_s = jnp.zeros((L, 1, 4 * Hp), jnp.float32)

    for l, (w_ih, w_hh, b_ih, b_hh) in enumerate(params):
        in_sz = w_ih.shape[1]
        w_ih_t = w_ih.T.astype(weight_dtype)      # (in_sz, 4H)
        w_hh_t = w_hh.T.astype(weight_dtype)      # (H, 4H)
        b = (b_ih + b_hh).astype(jnp.float32)     # (4H,)
        for g in range(4):
            wih_s = wih_s.at[l, :in_sz, g * Hp:g * Hp + H].set(
                w_ih_t[:, g * H:(g + 1) * H])
            whh_s = whh_s.at[l, :H, g * Hp:g * Hp + H].set(
                w_hh_t[:, g * H:(g + 1) * H])
            b_s = b_s.at[l, 0, g * Hp:g * Hp + H].set(b[g * H:(g + 1) * H])

    return dict(w_ih_t=wih_s, w_hh_t=whh_s, bias=b_s,
                num_layers=L, input_size=input_size, hidden_size=H,
                Hp=Hp, Kp=Kp)


# -----------------------------------------------------------------------------
# Forward: mirrors StackedLSTM.forward.
# -----------------------------------------------------------------------------
def stacked_lstm_forward(inp, hidden, packed):
    """inp: (B, input_size); hidden = (h_0, c_0), each (L, B, H).
    Returns (output, (h_1, c_1)) with output == h_1[-1]."""
    h0, c0 = hidden
    L = packed["num_layers"]
    H = packed["hidden_size"]
    I = packed["input_size"]
    Hp, Kp = packed["Hp"], packed["Kp"]
    B = inp.shape[0]
    Bp = _round_up(max(B, 8), 8)

    # Pad activations to aligned tiles (tiny, done once per call).
    x_p = jnp.zeros((Bp, Kp), jnp.float32).at[:B, :I].set(inp.astype(jnp.float32))
    h0_p = jnp.zeros((L, Bp, Hp), jnp.float32).at[:, :B, :H].set(h0.astype(jnp.float32))
    c0_p = jnp.zeros((L, Bp, Hp), jnp.float32).at[:, :B, :H].set(c0.astype(jnp.float32))

    kernel = functools.partial(_stacked_lstm_kernel, hp=Hp)

    h1_p, c1_p = pl.pallas_call(
        kernel,
        out_shape=(jax.ShapeDtypeStruct((L, Bp, Hp), jnp.float32),
                   jax.ShapeDtypeStruct((L, Bp, Hp), jnp.float32)),
        grid_spec=pltpu.PrefetchScalarGridSpec(
            num_scalar_prefetch=0,
            grid=(L,),
            in_specs=[
                pl.BlockSpec((Bp, Kp), lambda l: (0, 0)),            # x (layer 0 only)
                pl.BlockSpec((None, Bp, Hp), lambda l: (l, 0, 0)),    # h_0[l]
                pl.BlockSpec((None, Bp, Hp), lambda l: (l, 0, 0)),    # c_0[l]
                pl.BlockSpec((None, Kp, 4 * Hp), lambda l: (l, 0, 0)),  # W_ih^T[l]
                pl.BlockSpec((None, Hp, 4 * Hp), lambda l: (l, 0, 0)),  # W_hh^T[l]
                pl.BlockSpec((None, 1, 4 * Hp), lambda l: (l, 0, 0)),   # bias[l]
            ],
            out_specs=(
                pl.BlockSpec((None, Bp, Hp), lambda l: (l, 0, 0)),    # h_1[l]
                pl.BlockSpec((None, Bp, Hp), lambda l: (l, 0, 0)),    # c_1[l]
            ),
            scratch_shapes=[pltpu.VMEM((Bp, Kp), jnp.float32)],       # running layer input
        ),
        compiler_params=pltpu.CompilerParams(
            dimension_semantics=("arbitrary",)),                      # sequential layer chain
    )(x_p, h0_p, c0_p, packed["w_ih_t"], packed["w_hh_t"], packed["bias"])

    h_1 = h1_p[:, :B, :H].astype(h0.dtype)
    c_1 = c1_p[:, :B, :H].astype(c0.dtype)
    output = h_1[L - 1]
    return output, (h_1, c_1)


# -----------------------------------------------------------------------------
# Pure-JAX reference (mirrors torch code exactly) for correctness checking.
# -----------------------------------------------------------------------------
def _reference_lstm_cell(x, h, c, w_ih, w_hh, b_ih, b_hh):
    H = h.shape[-1]
    gates = x @ w_ih.T + b_ih + h @ w_hh.T + b_hh
    i = jax.nn.sigmoid(gates[:, 0 * H:1 * H])
    f = jax.nn.sigmoid(gates[:, 1 * H:2 * H])
    g = jnp.tanh(gates[:, 2 * H:3 * H])
    o = jax.nn.sigmoid(gates[:, 3 * H:4 * H])
    c1 = f * c + i * g
    h1 = o * jnp.tanh(c1)
    return h1, c1


def _reference_forward(inp, hidden, params):
    h0, c0 = hidden
    h_1, c_1 = [], []
    for i, (w_ih, w_hh, b_ih, b_hh) in enumerate(params):
        h_i, c_i = _reference_lstm_cell(inp, h0[i], c0[i], w_ih, w_hh, b_ih, b_hh)
        inp = h_i          # dropout: identity at inference
        h_1.append(h_i)
        c_1.append(c_i)
    return inp, (jnp.stack(h_1), jnp.stack(c_1))


if __name__ == "__main__":
    num_layers = 2
    batch = 4
    input_size = 48
    hidden_size = 32
    dropout = 0.3   # unused at inference (identity)

    key = jax.random.PRNGKey(0)
    kx, kh, kc, kp = jax.random.split(key, 4)

    x = jax.random.normal(kx, (batch, input_size), jnp.float32)
    h0 = jax.random.normal(kh, (num_layers, batch, hidden_size), jnp.float32)
    c0 = jax.random.normal(kc, (num_layers, batch, hidden_size), jnp.float32)
    params = init_stacked_lstm_params(kp, num_layers, input_size, hidden_size)

    ref_out, (ref_h1, ref_c1) = _reference_forward(x, (h0, c0), params)

    # ---- f32 weights (exactness check; default MXU precision -> loose-ish tol) ----
    packed_f32 = pack_stacked_lstm_params(params, input_size, hidden_size,
                                          weight_dtype=jnp.float32)
    out, (h1, c1) = stacked_lstm_forward(x, (h0, c0), packed_f32)
    out = jax.block_until_ready(out)
    h1 = jax.block_until_ready(h1)
    c1 = jax.block_until_ready(c1)

    assert out.shape == (batch, hidden_size)
    assert h1.shape == (num_layers, batch, hidden_size)
    assert c1.shape == (num_layers, batch, hidden_size)
    assert jnp.allclose(out, ref_out, atol=1e-3, rtol=1e-3)
    assert jnp.allclose(h1, ref_h1, atol=1e-3, rtol=1e-3)
    assert jnp.allclose(c1, ref_c1, atol=1e-3, rtol=1e-3)

    # ---- bf16 weights (recommended perf config: bf16 matmuls, f32 gate math) ----
    packed_bf16 = pack_stacked_lstm_params(params, input_size, hidden_size,
                                           weight_dtype=jnp.bfloat16)
    out_b, (h1_b, c1_b) = stacked_lstm_forward(x, (h0, c0), packed_bf16)
    out_b = jax.block_until_ready(out_b)
    assert jnp.allclose(out_b, ref_out, atol=5e-2, rtol=5e-2)
    assert jnp.allclose(h1_b, ref_h1, atol=5e-2, rtol=5e-2)
    assert jnp.allclose(c1_b, ref_c1, atol=5e-2, rtol=5e-2)

    print("KERNEL_OK")
</pallas_src>

<mosaic_0001>
module attributes {stable_mosaic.version = 11 : i64} {
  func.func @_stacked_lstm_kernel(%arg0: i32, %arg1: memref<8x128xf32, #tpu.memory_space<vmem>>, %arg2: memref<1x8x128xf32, #tpu.memory_space<vmem>>, %arg3: memref<1x8x128xf32, #tpu.memory_space<vmem>>, %arg4: memref<1x128x512xf32, #tpu.memory_space<vmem>>, %arg5: memref<1x128x512xf32, #tpu.memory_space<vmem>>, %arg6: memref<1x1x512xf32, #tpu.memory_space<vmem>>, %arg7: memref<1x8x128xf32, #tpu.memory_space<vmem>>, %arg8: memref<1x8x128xf32, #tpu.memory_space<vmem>>, %arg9: memref<8x128xf32, #tpu.memory_space<vmem>>) attributes {dimension_semantics = [#tpu.dimension_semantics<arbitrary>], iteration_bounds = array<i64: 2>, scalar_prefetch = 0 : i64, scratch_operands = 1 : i64, tpu.core_type = #tpu.core_type<tc>, window_params = [{pipeline_mode = #tpu.pipeline_mode<synchronous>, transform_indices = @transform_0, window_bounds = array<i64: 8, 128>}, {transform_indices = @transform_1, window_bounds = array<i64: 1, 8, 128>}, {transform_indices = @transform_2, window_bounds = array<i64: 1, 8, 128>}, {transform_indices = @transform_3, window_bounds = array<i64: 1, 128, 512>}, {transform_indices = @transform_4, window_bounds = array<i64: 1, 128, 512>}, {transform_indices = @transform_5, window_bounds = array<i64: 1, 1, 512>}, {transform_indices = @transform_6, window_bounds = array<i64: 1, 8, 128>}, {transform_indices = @transform_7, window_bounds = array<i64: 1, 8, 128>}]} {
    %c0_i32 = arith.constant 0 : i32
    %0 = arith.cmpi eq, %arg0, %c0_i32 : i32
    %1 = arith.extui %0 : i1 to i32
    %c0_i32_0 = arith.constant 0 : i32
    %2 = arith.cmpi ne, %1, %c0_i32_0 : i32
    scf.if %2 {
      %c0_28 = arith.constant 0 : index
      %c0_29 = arith.constant 0 : index
      %54 = vector.load %arg1[%c0_28, %c0_29] : memref<8x128xf32, #tpu.memory_space<vmem>>, vector<8x128xf32>
      %c0_30 = arith.constant 0 : index
      %c0_31 = arith.constant 0 : index
      %55 = vector.load %arg9[%c0_30, %c0_31] : memref<8x128xf32, #tpu.memory_space<vmem>>, vector<8x128xf32>
      tpu.vector_store %arg9[%c0_30, %c0_31], %54 {strides = array<i32>} : memref<8x128xf32, #tpu.memory_space<vmem>>, vector<8x128xf32>,
    } else {
    }
    %c0 = arith.constant 0 : index
    %c0_1 = arith.constant 0 : index
    %3 = vector.load %arg9[%c0, %c0_1] : memref<8x128xf32, #tpu.memory_space<vmem>>, vector<8x128xf32>
    %c0_2 = arith.constant 0 : index
    %c0_3 = arith.constant 0 : index
    %c0_4 = arith.constant 0 : index
    %4 = vector.load %arg2[%c0_2, %c0_3, %c0_4] : memref<1x8x128xf32, #tpu.memory_space<vmem>>, vector<1x8x128xf32>
    %5 = vector.shape_cast %4 : vector<1x8x128xf32> to vector<8x128xf32>
    %c0_5 = arith.constant 0 : index
    %c0_6 = arith.constant 0 : index
    %c0_7 = arith.constant 0 : index
    %6 = vector.load %arg3[%c0_5, %c0_6, %c0_7] : memref<1x8x128xf32, #tpu.memory_space<vmem>>, vector<1x8x128xf32>
    %7 = vector.shape_cast %6 : vector<1x8x128xf32> to vector<8x128xf32>
    %c0_8 = arith.constant 0 : index
    %c0_9 = arith.constant 0 : index
    %c0_10 = arith.constant 0 : index
    %8 = vector.load %arg4[%c0_8, %c0_9, %c0_10] : memref<1x128x512xf32, #tpu.memory_space<vmem>>, vector<1x128x512xf32>
    %9 = vector.shape_cast %8 : vector<1x128x512xf32> to vector<128x512xf32>
    %c0_11 = arith.constant 0 : index
    %c0_12 = arith.constant 0 : index
    %c0_13 = arith.constant 0 : index
    %10 = vector.load %arg5[%c0_11, %c0_12, %c0_13] : memref<1x128x512xf32, #tpu.memory_space<vmem>>, vector<1x128x512xf32>
    %11 = vector.shape_cast %10 : vector<1x128x512xf32> to vector<128x512xf32>
    %cst = arith.constant dense<0.000000e+00> : vector<8x512xf32>
    %12 = tpu.matmul %3, %9, %cst {dimension_numbers = #tpu.dot_dimension_numbers<[1], [0], [0], [1], [0, 0, 1, 1], [], []>} : vector<8x128xf32>, vector<128x512xf32>, vector<8x512xf32> -> vector<8x512xf32>
    %cst_14 = arith.constant dense<0.000000e+00> : vector<8x512xf32>
    %13 = tpu.matmul %5, %11, %cst_14 {dimension_numbers = #tpu.dot_dimension_numbers<[1], [0], [0], [1], [0, 0, 1, 1], [], []>} : vector<8x128xf32>, vector<128x512xf32>, vector<8x512xf32> -> vector<8x512xf32>
    %14 = arith.addf %12, %13 : vector<8x512xf32>
    %c0_15 = arith.constant 0 : index
    %c0_16 = arith.constant 0 : index
    %c0_17 = arith.constant 0 : index
    %15 = vector.load %arg6[%c0_15, %c0_16, %c0_17] : memref<1x1x512xf32, #tpu.memory_space<vmem>>, vector<1x1x512xf32>
    %16 = vector.shape_cast %15 : vector<1x1x512xf32> to vector<1x512xf32>
    %17 = vector.broadcast %16 : vector<1x512xf32> to vector<8x512xf32>
    %18 = arith.addf %14, %17 : vector<8x512xf32>
    %19 = vector.extract_strided_slice %18 {offsets = [0, 0], sizes = [8, 128], strides = [1, 1]} : vector<8x512xf32> to vector<8x128xf32>
    %20 = arith.negf %19 : vector<8x128xf32>
    %21 = math.exp %20 : vector<8x128xf32>
    %cst_18 = arith.constant 1.000000e+00 : f32
    %22 = vector.broadcast %cst_18 : f32 to vector<8x128xf32>
    %23 = arith.addf %22, %21 : vector<8x128xf32>
    %24 = arith.divf %22, %23 : vector<8x128xf32>
    %25 = vector.extract_strided_slice %18 {offsets = [0, 128], sizes = [8, 128], strides = [1, 1]} : vector<8x512xf32> to vector<8x128xf32>
    %26 = arith.negf %25 : vector<8x128xf32>
    %27 = math.exp %26 : vector<8x128xf32>
    %cst_19 = arith.constant 1.000000e+00 : f32
    %28 = vector.broadcast %cst_19 : f32 to vector<8x128xf32>
    %29 = arith.addf %28, %27 : vector<8x128xf32>
    %30 = arith.divf %28, %29 : vector<8x128xf32>
    %31 = vector.extract_strided_slice %18 {offsets = [0, 256], sizes = [8, 128], strides = [1, 1]} : vector<8x512xf32> to vector<8x128xf32>
    %32 = math.tanh %31 : vector<8x128xf32>
    %33 = vector.extract_strided_slice %18 {offsets = [0, 384], sizes = [8, 128], strides = [1, 1]} : vector<8x512xf32> to vector<8x128xf32>
    %34 = arith.negf %33 : vector<8x128xf32>
    %35 = math.exp %34 : vector<8x128xf32>
    %cst_20 = arith.constant 1.000000e+00 : f32
    %36 = vector.broadcast %cst_20 : f32 to vector<8x128xf32>
    %37 = arith.addf %36, %35 : vector<8x128xf32>
    %38 = arith.divf %36, %37 : vector<8x128xf32>
    %39 = arith.mulf %30, %7 : vector<8x128xf32>
    %40 = arith.mulf %24, %32 : vector<8x128xf32>
    %41 = arith.addf %39, %40 : vector<8x128xf32>
    %42 = math.tanh %41 : vector<8x128xf32>
    %43 = arith.mulf %38, %42 : vector<8x128xf32>
    %c0_21 = arith.constant 0 : index
    %c0_22 = arith.constant 0 : index
    %c0_23 = arith.constant 0 : index
    %44 = vector.load %arg7[%c0_21, %c0_22, %c0_23] : memref<1x8x128xf32, #tpu.memory_space<vmem>>, vector<1x8x128xf32>
    %45 = vector.shape_cast %44 : vector<1x8x128xf32> to vector<8x128xf32>
    %46 = vector.shape_cast %43 : vector<8x128xf32> to vector<1x8x128xf32>
    tpu.vector_store %arg7[%c0_21, %c0_22, %c0_23], %46 {strides = array<i32>} : memref<1x8x128xf32, #tpu.memory_space<vmem>>, vector<1x8x128xf32>,
    %c0_24 = arith.constant 0 : index
    %c0_25 = arith.constant 0 : index
    %c0_26 = arith.constant 0 : index
    %47 = vector.load %arg8[%c0_24, %c0_25, %c0_26] : memref<1x8x128xf32, #tpu.memory_space<vmem>>, vector<1x8x128xf32>
    %48 = vector.shape_cast %47 : vector<1x8x128xf32> to vector<8x128xf32>
    %49 = vector.shape_cast %41 : vector<8x128xf32> to vector<1x8x128xf32>
    tpu.vector_store %arg8[%c0_24, %c0_25, %c0_26], %49 {strides = array<i32>} : memref<1x8x128xf32, #tpu.memory_space<vmem>>, vector<1x8x128xf32>,
    %c1_i32 = arith.constant 1 : i32
    %50 = arith.addi %arg0, %c1_i32 : i32
    %c2_i32 = arith.constant 2 : i32
    %51 = arith.cmpi slt, %50, %c2_i32 : i32
    %52 = arith.extui %51 : i1 to i32
    %c0_i32_27 = arith.constant 0 : i32
    %53 = arith.cmpi ne, %52, %c0_i32_27 : i32
    scf.if %53 {
      %c0_28 = arith.constant 0 : index
      %c0_29 = arith.constant 0 : index
      %54 = vector.load %arg9[%c0_28, %c0_29] : memref<8x128xf32, #tpu.memory_space<vmem>>, vector<8x128xf32>
      tpu.vector_store %arg9[%c0_28, %c0_29], %43 {strides = array<i32>} : memref<8x128xf32, #tpu.memory_space<vmem>>, vector<8x128xf32>,
    } else {
    }
    return
  }
  func.func @transform_0(%arg0: i32) -> (i32, i32) {
    %c0_i32 = arith.constant 0 : i32
    %c0_i32_0 = arith.constant 0 : i32
    %c0_i32_1 = arith.constant 0 : i32
    return %c0_i32, %c0_i32_0 : i32, i32
  }
  func.func @transform_1(%arg0: i32) -> (i32, i32, i32) {
    %c0_i32 = arith.constant 0 : i32
    %c0_i32_0 = arith.constant 0 : i32
    %c0_i32_1 = arith.constant 0 : i32
    return %arg0, %c0_i32, %c0_i32_0 : i32, i32, i32
  }
  func.func @transform_2(%arg0: i32) -> (i32, i32, i32) {
    %c0_i32 = arith.constant 0 : i32
    %c0_i32_0 = arith.constant 0 : i32
    %c0_i32_1 = arith.constant 0 : i32
    return %arg0, %c0_i32, %c0_i32_0 : i32, i32, i32
  }
  func.func @transform_3(%arg0: i32) -> (i32, i32, i32) {
    %c0_i32 = arith.constant 0 : i32
    %c0_i32_0 = arith.constant 0 : i32
    %c0_i32_1 = arith.constant 0 : i32
    return %arg0, %c0_i32, %c0_i32_0 : i32, i32, i32
  }
  func.func @transform_4(%arg0: i32) -> (i32, i32, i32) {
    %c0_i32 = arith.constant 0 : i32
    %c0_i32_0 = arith.constant 0 : i32
    %c0_i32_1 = arith.constant 0 : i32
    return %arg0, %c0_i32, %c0_i32_0 : i32, i32, i32
  }
  func.func @transform_5(%arg0: i32) -> (i32, i32, i32) {
    %c0_i32 = arith.constant 0 : i32
    %c0_i32_0 = arith.constant 0 : i32
    %c0_i32_1 = arith.constant 0 : i32
    return %arg0, %c0_i32, %c0_i32_0 : i32, i32, i32
  }
  func.func @transform_6(%arg0: i32) -> (i32, i32, i32) {
    %c0_i32 = arith.constant 0 : i32
    %c0_i32_0 = arith.constant 0 : i32
    %c0_i32_1 = arith.constant 0 : i32
    return %arg0, %c0_i32, %c0_i32_0 : i32, i32, i32
  }
  func.func @transform_7(%arg0: i32) -> (i32, i32, i32) {
    %c0_i32 = arith.constant 0 : i32
    %c0_i32_0 = arith.constant 0 : i32
    %c0_i32_1 = arith.constant 0 : i32
    return %arg0, %c0_i32, %c0_i32_0 : i32, i32, i32
  }
}

</mosaic_0001>

<llo_original>
// kernel: tpu_custom_call.1
$region0: #{tpu_custom_call.1}
  #allocation0 [shape = 'u32[]', space=smem, size = 0x4, offset = 0x4, fixed_abs, tag = 'smem constant byte address 0x4 - core index']
  #allocation1 [shape = 'u32[144,128]{1,0:T(1,128)}', space=vmem, size = 0x12000, scoped, tag = 'internal scratch']
  #allocation2 [shape = 'f32[8,128]{1,0:T(8,128)}', space=vmem, size = 0x1000, scoped, tag = 'scratch operand']
  %s0 = inlined_call_operand.hbm [shape: f32[8,128], index: 0, kind: input, shape index: {}]
  %s1 = inlined_call_operand.hbm [shape: f32[2,8,128], index: 1, kind: input, shape index: {}]
  %s2 = inlined_call_operand.hbm [shape: f32[2,8,128], index: 2, kind: input, shape index: {}]
  %s3 = inlined_call_operand.hbm [shape: f32[2,128,512], index: 3, kind: input, shape index: {}]
  %s4 = inlined_call_operand.hbm [shape: f32[2,128,512], index: 4, kind: input, shape index: {}]
  %s5 = inlined_call_operand.vmem [shape: f32[2,1,512], index: 5, kind: input, shape index: {}]
  %s6 = inlined_call_operand.hbm [shape: f32[2,8,128], index: 6, kind: output, shape index: {0}]
  %s7 = inlined_call_operand.hbm [shape: f32[2,8,128], index: 7, kind: output, shape index: {1}]
  %8 = xla_tuple %s6, %s7
  %s9 = sld [smem:[#allocation0]]
  $region93: #{tpu_custom_call.1} parent=0
    _
  %s11 = ssub.s32 1, %s9
  %s12 = scalar_select 0, %s11, %s9
  $region1: #{tpu_custom_call.1} parent=0
    #allocation3 [shape = 'u8[4096]{0}', space=vmem, size = 0x1000, scoped, tag = 'input window, operand 0, single buffered']
    #allocation4 [shape = 's32[2]{0}', space=sflag, size = 0x8, scoped, tag = 'scoped memory for tpu_custom_call.1']
    #allocation5 [shape = 's32[2]{0}', space=sflag, size = 0x8, scoped, tag = 'scoped memory for tpu_custom_call.1']
    #allocation6 [shape = 'u8[8192]{0}', space=vmem, size = 0x2000, scoped, tag = 'input window, operand 1']
    #allocation7 [shape = 's32[2]{0}', space=sflag, size = 0x8, scoped, tag = 'scoped memory for tpu_custom_call.1']
    #allocation8 [shape = 'u8[8192]{0}', space=vmem, size = 0x2000, scoped, tag = 'input window, operand 2']
    #allocation9 [shape = 'u8[524288]{0}', space=vmem, size = 0x80000, scoped, tag = 'input window, operand 3']
    #allocation10 [shape = 's32[2]{0}', space=sflag, size = 0x8, scoped, tag = 'scoped memory for tpu_custom_call.1']
    #allocation11 [shape = 'u8[524288]{0}', space=vmem, size = 0x80000, scoped, tag = 'input window, operand 4']
    #allocation12 [shape = 'u8[8192]{0}', space=vmem, size = 0x2000, scoped, tag = 'output window, operand 0']
    #allocation13 [shape = 'u8[8192]{0}', space=vmem, size = 0x2000, scoped, tag = 'output window, operand 1']
    #allocation14 [shape = 's32[2]{0}', space=sflag, size = 0x8, scoped, tag = 'scoped memory for tpu_custom_call.1']
    %13 = vsyncpa [#allocation4], 0
    %14 = vsyncpa [#allocation7], 0
    %s15 = scalar_lea.sflag [#allocation7], 1
    %16 = vsyncpa %s15, 0
    %17 = vsyncpa [#allocation10], 0
    %s18 = scalar_lea.sflag [#allocation10], 1
    %19 = vsyncpa %s18, 0
    %20 = vsyncpa [#allocation5], 0
    %s21 = scalar_lea.sflag [#allocation5], 1
    %22 = vsyncpa %s21, 0
    %23 = vsyncpa [#allocation14], 0
    %s24 = scalar_lea.sflag [#allocation14], 1
    %25 = vsyncpa %s24, 0
    loop: start=0, step=1, limit=4
    $region2: #{tpu_custom_call.1} parent=1 // loop_pre_header
      _
    $region3: #{tpu_custom_call.1} parent=1 // loop_header
      %s27 = sphi 0, %s31
      %p28 = scmp.ge.s32.totalorder %s27, 4
      %s35 = sphi 0, %s35
      %s37 = sphi 0, %s35
      %s38 = sphi 0, %s37
      %s52 = sphi 0, %s38
      %s58 = sphi 0, %s60
      %s61 = sphi 0, %s58
      %s62 = sphi 0, %s61
      %s78 = sphi 0, %s62
      %s84 = sphi 0, %s86
      %s87 = sphi 0, %s84
      %s88 = sphi 0, %s87
      %s104 = sphi 0, %s88
      %s110 = sphi 0, %s112
      %s113 = sphi 0, %s110
      %s114 = sphi 0, %s113
      %s130 = sphi 0, %s114
      %s136 = sphi 0, %s138
      %s139 = sphi 0, %s136
      %s140 = sphi 0, %s139
      %s156 = sphi 0, %s140
      %s162 = sphi 0, %s164
      %s165 = sphi 0, %s162
      %s166 = sphi 0, %s165
      %s182 = sphi 0, %s166
      %s188 = sphi 0, %s190
      %s191 = sphi 0, %s188
      %s192 = sphi 0, %s191
      %s208 = sphi 0, %s192
      %s214 = sphi 0, %s216
      %s217 = sphi 0, %s214
      %s218 = sphi 0, %s217
      %s234 = sphi 0, %s218
    $region4: #{tpu_custom_call.1} parent=1 // loop_header_branch
      %30 = sbr.rel (%p28) target = $region8
    $region5: #{tpu_custom_call.1} parent=1 // loop_body
      %s32 = ssub.s32 %s27, 1
      %s33 = ssub.s32 %s27, 2
      %s34 = sadd.s32 %s27, 1
      %s36 = sadd.s32 %s35, 1
      %p39 = scmp.eq.s32.totalorder %s27, 1
      %p40 = scmp.ne.s32.totalorder %s35, %s37
      %p41 = scmp.eq.s32.totalorder %s27, 0
      %p42 = por %p40, %p41
      %p43 = scmp.ne.s32.totalorder %s35, %s37
      %p44 = scmp.eq.s32.totalorder %s32, 1
      %p45 = por %p43, %p44
      %p46 = scmp.ne.s32.totalorder %s37, %s38
      %p47 = scmp.eq.s32.totalorder %s32, 0
      %p48 = por %p46, %p47
      %p49 = scmp.ne.s32.totalorder %s37, %s38
      %p50 = scmp.eq.s32.totalorder %s33, 1
      %p51 = por %p49, %p50
      %p53 = scmp.ne.s32.totalorder %s38, %s52
      %p54 = scmp.eq.s32.totalorder %s33, 0
      %p55 = por %p53, %p54
      %s56 = ssub.s32 %s27, %s34
      %p57 = scmp.eq.s32.totalorder %s56, 0
      %s59 = sadd.s32 %s58, 1
      %s60 = scalar_select %p57, %s58, %s59
      %p63 = pneg %p57
      %p64 = scmp.eq.s32.totalorder %s27, 1
      %p65 = por %p63, %p64
      %p66 = scmp.ne.s32.totalorder %s58, %s61
      %p67 = scmp.eq.s32.totalorder %s27, 0
      %p68 = por %p66, %p67
      %p69 = scmp.ne.s32.totalorder %s58, %s61
      %p70 = scmp.eq.s32.totalorder %s32, 1
      %p71 = por %p69, %p70
      %p72 = scmp.ne.s32.totalorder %s61, %s62
      %p73 = scmp.eq.s32.totalorder %s32, 0
      %p74 = por %p72, %p73
      %p75 = scmp.ne.s32.totalorder %s61, %s62
      %p76 = scmp.eq.s32.totalorder %s33, 1
      %p77 = por %p75, %p76
      %p79 = scmp.ne.s32.totalorder %s62, %s78
      %p80 = scmp.eq.s32.totalorder %s33, 0
      %p81 = por %p79, %p80
      %s82 = ssub.s32 %s27, %s34
      %p83 = scmp.eq.s32.totalorder %s82, 0
      %s85 = sadd.s32 %s84, 1
      %s86 = scalar_select %p83, %s84, %s85
      %p89 = pneg %p83
      %p90 = scmp.eq.s32.totalorder %s27, 1
      %p91 = por %p89, %p90
      %p92 = scmp.ne.s32.totalorder %s84, %s87
      %p93 = scmp.eq.s32.totalorder %s27, 0
      %p94 = por %p92, %p93
      %p95 = scmp.ne.s32.totalorder %s84, %s87
      %p96 = scmp.eq.s32.totalorder %s32, 1
      %p97 = por %p95, %p96
      %p98 = scmp.ne.s32.totalorder %s87, %s88
      %p99 = scmp.eq.s32.totalorder %s32, 0
      %p100 = por %p98, %p99
      %p101 = scmp.ne.s32.totalorder %s87, %s88
      %p102 = scmp.eq.s32.totalorder %s33, 1
      %p103 = por %p101, %p102
      %p105 = scmp.ne.s32.totalorder %s88, %s104
      %p106 = scmp.eq.s32.totalorder %s33, 0
      %p107 = por %p105, %p106
      %s108 = ssub.s32 %s27, %s34
      %p109 = scmp.eq.s32.totalorder %s108, 0
      %s111 = sadd.s32 %s110, 1
      %s112 = scalar_select %p109, %s110, %s111
      %p115 = pneg %p109
      %p116 = scmp.eq.s32.totalorder %s27, 1
      %p117 = por %p115, %p116
      %p118 = scmp.ne.s32.totalorder %s110, %s113
      %p119 = scmp.eq.s32.totalorder %s27, 0
      %p120 = por %p118, %p119
      %p121 = scmp.ne.s32.totalorder %s110, %s113
      %p122 = scmp.eq.s32.totalorder %s32, 1
      %p123 = por %p121, %p122
      %p124 = scmp.ne.s32.totalorder %s113, %s114
      %p125 = scmp.eq.s32.totalorder %s32, 0
      %p126 = por %p124, %p125
      %p127 = scmp.ne.s32.totalorder %s113, %s114
      %p128 = scmp.eq.s32.totalorder %s33, 1
      %p129 = por %p127, %p128
      %p131 = scmp.ne.s32.totalorder %s114, %s130
      %p132 = scmp.eq.s32.totalorder %s33, 0
      %p133 = por %p131, %p132
      %s134 = ssub.s32 %s27, %s34
      %p135 = scmp.eq.s32.totalorder %s134, 0
      %s137 = sadd.s32 %s136, 1
      %s138 = scalar_select %p135, %s136, %s137
      %p141 = pneg %p135
      %p142 = scmp.eq.s32.totalorder %s27, 1
      %p143 = por %p141, %p142
      %p144 = scmp.ne.s32.totalorder %s136, %s139
      %p145 = scmp.eq.s32.totalorder %s27, 0
      %p146 = por %p144, %p145
      %p147 = scmp.ne.s32.totalorder %s136, %s139
      %p148 = scmp.eq.s32.totalorder %s32, 1
      %p149 = por %p147, %p148
      %p150 = scmp.ne.s32.totalorder %s139, %s140
      %p151 = scmp.eq.s32.totalorder %s32, 0
      %p152 = por %p150, %p151
      %p153 = scmp.ne.s32.totalorder %s139, %s140
      %p154 = scmp.eq.s32.totalorder %s33, 1
      %p155 = por %p153, %p154
      %p157 = scmp.ne.s32.totalorder %s140, %s156
      %p158 = scmp.eq.s32.totalorder %s33, 0
      %p159 = por %p157, %p158
      %s160 = ssub.s32 %s27, %s34
      %p161 = scmp.eq.s32.totalorder %s160, 0
      %s163 = sadd.s32 %s162, 1
      %s164 = scalar_select %p161, %s162, %s163
      %p167 = pneg %p161
      %p168 = scmp.eq.s32.totalorder %s27, 1
      %p169 = por %p167, %p168
      %p170 = scmp.ne.s32.totalorder %s162, %s165
      %p171 = scmp.eq.s32.totalorder %s27, 0
      %p172 = por %p170, %p171
      %p173 = scmp.ne.s32.totalorder %s162, %s165
      %p174 = scmp.eq.s32.totalorder %s32, 1
      %p175 = por %p173, %p174
      %p176 = scmp.ne.s32.totalorder %s165, %s166
      %p177 = scmp.eq.s32.totalorder %s32, 0
      %p178 = por %p176, %p177
      %p179 = scmp.ne.s32.totalorder %s165, %s166
      %p180 = scmp.eq.s32.totalorder %s33, 1
      %p181 = por %p179, %p180
      %p183 = scmp.ne.s32.totalorder %s166, %s182
      %p184 = scmp.eq.s32.totalorder %s33, 0
      %p185 = por %p183, %p184
      %s186 = ssub.s32 %s27, %s34
      %p187 = scmp.eq.s32.totalorder %s186, 0
      %s189 = sadd.s32 %s188, 1
      %s190 = scalar_select %p187, %s188, %s189
      %p193 = pneg %p187
      %p194 = scmp.eq.s32.totalorder %s27, 1
      %p195 = por %p193, %p194
      %p196 = scmp.ne.s32.totalorder %s188, %s191
      %p197 = scmp.eq.s32.totalorder %s27, 0
      %p198 = por %p196, %p197
      %p199 = scmp.ne.s32.totalorder %s188, %s191
      %p200 = scmp.eq.s32.totalorder %s32, 1
      %p201 = por %p199, %p200
      %p202 = scmp.ne.s32.totalorder %s191, %s192
      %p203 = scmp.eq.s32.totalorder %s32, 0
      %p204 = por %p202, %p203
      %p205 = scmp.ne.s32.totalorder %s191, %s192
      %p206 = scmp.eq.s32.totalorder %s33, 1
      %p207 = por %p205, %p206
      %p209 = scmp.ne.s32.totalorder %s192, %s208
      %p210 = scmp.eq.s32.totalorder %s33, 0
      %p211 = por %p209, %p210
      %s212 = ssub.s32 %s27, %s34
      %p213 = scmp.eq.s32.totalorder %s212, 0
      %s215 = sadd.s32 %s214, 1
      %s216 = scalar_select %p213, %s214, %s215
      %p219 = pneg %p213
      %p220 = scmp.eq.s32.totalorder %s27, 1
      %p221 = por %p219, %p220
      %p222 = scmp.ne.s32.totalorder %s214, %s217
      %p223 = scmp.eq.s32.totalorder %s27, 0
      %p224 = por %p222, %p223
      %p225 = scmp.ne.s32.totalorder %s214, %s217
      %p226 = scmp.eq.s32.totalorder %s32, 1
      %p227 = por %p225, %p226
      %p228 = scmp.ne.s32.totalorder %s217, %s218
      %p229 = scmp.eq.s32.totalorder %s32, 0
      %p230 = por %p228, %p229
      %p231 = scmp.ne.s32.totalorder %s217, %s218
      %p232 = scmp.eq.s32.totalorder %s33, 1
      %p233 = por %p231, %p232
      %p235 = scmp.ne.s32.totalorder %s218, %s234
      %p236 = scmp.eq.s32.totalorder %s33, 0
      %p237 = por %p235, %p236
      %p238 = scmp.le.s32.totalorder 1, %s27
      %p239 = scmp.lt.s32.totalorder %s27, 3
      %p240 = pnand %p238, %p239
      %p241 = pneg %p240
      // Predicated region
      $region9: #{tpu_custom_call.1} parent=5 // pred_check
        _
      $region10: #{tpu_custom_call.1} parent=5 // pred_check_branch
        %243 = sbr.rel (%p240) target = $region12
      $region11: #{tpu_custom_call.1} parent=5 // pred_region
        %s244 = ssub.s32 %s27, 1
        // Predicated region
        $region13: #{tpu_custom_call.1} parent=11 // pred_check
          %p245 = pneg %p48
        $region14: #{tpu_custom_call.1} parent=11 // pred_check_branch
          %247 = sbr.rel (%p245) target = $region16
        $region15: #{tpu_custom_call.1} parent=11 // pred_region
          %s249 = ssub.s32 128, 128
          %250 = vsyncadd [#allocation4], %s249
          %s252 = sshll.u32 [#allocation3], 4
          %s253 = int_to_ptr.vmem [resolvable:$true] %s252
          %255 = dma.hbm_to_vmem [thread:$0]  %s0, 128, %s253, [#allocation4]
        $region16: #{tpu_custom_call.1} parent=11 // pred_fallthru
          _
      $region12: #{tpu_custom_call.1} parent=5 // pred_fallthru
        _
      %p256 = scmp.lt.s32.totalorder %s27, 2
      // Predicated region
      $region17: #{tpu_custom_call.1} parent=5 // pred_check
        %p257 = pneg %p256
      $region18: #{tpu_custom_call.1} parent=5 // pred_check_branch
        %259 = sbr.rel (%p257) target = $region20
      $region19: #{tpu_custom_call.1} parent=5 // pred_region
        // Predicated region
        $region21: #{tpu_custom_call.1} parent=19 // pred_check
          %p260 = pneg %p68
        $region22: #{tpu_custom_call.1} parent=19 // pred_check_branch
          %262 = sbr.rel (%p260) target = $region24
        $region23: #{tpu_custom_call.1} parent=19 // pred_region
          %s263 = sand.u32 %s27, 1
          %s264 = scalar_lea.sflag [#allocation7], %s263
          %s265 = sand.u32 %s58, 1
          %s266 = smul.addr %s265, 8
          %s267 = scalar_lea.vmem [#allocation6], %s266
          %s269 = ssub.s32 128, 128
          %270 = vsyncadd %s264, %s269
          %s271 = smul.addr %s27, 128
          %s272 = scalar_lea.hbm %s1, %s271
          %s274 = sshll.u32 %s267, 4
          %s275 = int_to_ptr.vmem [resolvable:$true] %s274
          %277 = dma.hbm_to_vmem [thread:$0]  %s272, 128, %s275, %s264
        $region24: #{tpu_custom_call.1} parent=19 // pred_fallthru
          _
        // Predicated region
        $region25: #{tpu_custom_call.1} parent=19 // pred_check
          %p278 = pneg %p94
        $region26: #{tpu_custom_call.1} parent=19 // pred_check_branch
          %280 = sbr.rel (%p278) target = $region28
        $region27: #{tpu_custom_call.1} parent=19 // pred_region
          %s281 = sand.u32 %s27, 1
          %s282 = scalar_lea.sflag [#allocation7], %s281
          %s283 = sand.u32 %s84, 1
          %s284 = smul.addr %s283, 8
          %s285 = scalar_lea.vmem [#allocation8], %s284
          %s287 = ssub.s32 128, 128
          %288 = vsyncadd %s282, %s287
          %s289 = smul.addr %s27, 128
          %s290 = scalar_lea.hbm %s2, %s289
          %s292 = sshll.u32 %s285, 4
          %s293 = int_to_ptr.vmem [resolvable:$true] %s292
          %295 = dma.hbm_to_vmem [thread:$0]  %s290, 128, %s293, %s282
        $region28: #{tpu_custom_call.1} parent=19 // pred_fallthru
          _
        // Predicated region
        $region29: #{tpu_custom_call.1} parent=19 // pred_check
          %p296 = pneg %p120
        $region30: #{tpu_custom_call.1} parent=19 // pred_check_branch
          %298 = sbr.rel (%p296) target = $region32
        $region31: #{tpu_custom_call.1} parent=19 // pred_region
          %s299 = sand.u32 %s27, 1
          %s300 = scalar_lea.sflag [#allocation10], %s299
          %s301 = sand.u32 %s110, 1
          %s302 = smul.addr %s301, 512
          %s303 = scalar_lea.vmem [#allocation9], %s302
          %s305 = ssub.s32 8192, 8192
          %306 = vsyncadd %s300, %s305
          %s307 = smul.addr %s27, 64
          %s308 = smul.addr %s307, 128
          %s309 = scalar_lea.hbm %s3, %s308
          %s310 = sshll.u32 %s303, 4
          %s311 = int_to_ptr.vmem [resolvable:$true] %s310
          %316 = dma.hbm_to_vmem [thread:$0]  %s309, 8192, %s311, %s300, 512, 512, 32
        $region32: #{tpu_custom_call.1} parent=19 // pred_fallthru
          _
        // Predicated region
        $region33: #{tpu_custom_call.1} parent=19 // pred_check
          %p317 = pneg %p146
        $region34: #{tpu_custom_call.1} parent=19 // pred_check_branch
          %319 = sbr.rel (%p317) target = $region36
        $region35: #{tpu_custom_call.1} parent=19 // pred_region
          %s320 = sand.u32 %s27, 1
          %s321 = scalar_lea.sflag [#allocation10], %s320
          %s322 = sand.u32 %s136, 1
          %s323 = smul.addr %s322, 512
          %s324 = scalar_lea.vmem [#allocation11], %s323
          %s326 = ssub.s32 8192, 8192
          %327 = vsyncadd %s321, %s326
          %s328 = smul.addr %s27, 64
          %s329 = smul.addr %s328, 128
          %s330 = scalar_lea.hbm %s4, %s329
          %s331 = sshll.u32 %s324, 4
          %s332 = int_to_ptr.vmem [resolvable:$true] %s331
          %337 = dma.hbm_to_vmem [thread:$0]  %s330, 8192, %s332, %s321, 512, 512, 32
        $region36: #{tpu_custom_call.1} parent=19 // pred_fallthru
          _
        // Predicated region
        $region37: #{tpu_custom_call.1} parent=19 // pred_check
          %p338 = pneg %p172
        $region38: #{tpu_custom_call.1} parent=19 // pred_check_branch
          %340 = sbr.rel (%p338) target = $region40
        $region39: #{tpu_custom_call.1} parent=19 // pred_region
          %p341 = scmp.lt.s32.totalorder %s27, 1
          %s342 = scalar_select %p341, %s27, 1
          %s343 = smul.addr %s342, 4
          %s344 = scalar_lea.vmem %s5, %s343
        $region40: #{tpu_custom_call.1} parent=19 // pred_fallthru
          _
      $region20: #{tpu_custom_call.1} parent=5 // pred_fallthru
        _
      %p345 = scmp.le.s32.totalorder 1, %s27
      %p346 = scmp.lt.s32.totalorder %s27, 3
      %p347 = pnand %p345, %p346
      %p348 = pneg %p347
      // Predicated region
      $region41: #{tpu_custom_call.1} parent=5 // pred_check
        _
      $region42: #{tpu_custom_call.1} parent=5 // pred_check_branch
        %350 = sbr.rel (%p347) target = $region44
      $region43: #{tpu_custom_call.1} parent=5 // pred_region
        %s351 = ssub.s32 %s27, 1
        // Predicated region
        $region45: #{tpu_custom_call.1} parent=43 // pred_check
          %p352 = pneg %p48
        $region46: #{tpu_custom_call.1} parent=43 // pred_check_branch
          %354 = sbr.rel (%p352) target = $region48
        $region47: #{tpu_custom_call.1} parent=43 // pred_region
          %355 = dma.done [#allocation4], 128
        $region48: #{tpu_custom_call.1} parent=43 // pred_fallthru
          _
        %s356 = sand.u32 %s32, 1
        %s357 = scalar_lea.sflag [#allocation7], %s356
        %s358 = sand.u32 %s61, 1
        %s359 = smul.addr %s358, 8
        %s360 = scalar_lea.vmem [#allocation6], %s359
        // Predicated region
        $region49: #{tpu_custom_call.1} parent=43 // pred_check
          %p361 = pneg %p74
        $region50: #{tpu_custom_call.1} parent=43 // pred_check_branch
          %363 = sbr.rel (%p361) target = $region52
        $region51: #{tpu_custom_call.1} parent=43 // pred_region
          %364 = dma.done %s357, 128
        $region52: #{tpu_custom_call.1} parent=43 // pred_fallthru
          _
        %s365 = sand.u32 %s32, 1
        %s366 = scalar_lea.sflag [#allocation7], %s365
        %s367 = sand.u32 %s87, 1
        %s368 = smul.addr %s367, 8
        %s369 = scalar_lea.vmem [#allocation8], %s368
        // Predicated region
        $region53: #{tpu_custom_call.1} parent=43 // pred_check
          %p370 = pneg %p100
        $region54: #{tpu_custom_call.1} parent=43 // pred_check_branch
          %372 = sbr.rel (%p370) target = $region56
        $region55: #{tpu_custom_call.1} parent=43 // pred_region
          %373 = dma.done %s366, 128
        $region56: #{tpu_custom_call.1} parent=43 // pred_fallthru
          _
        %s374 = sand.u32 %s32, 1
        %s375 = scalar_lea.sflag [#allocation10], %s374
        %s376 = sand.u32 %s113, 1
        %s377 = smul.addr %s376, 512
        %s378 = scalar_lea.vmem [#allocation9], %s377
        // Predicated region
        $region57: #{tpu_custom_call.1} parent=43 // pred_check
          %p379 = pneg %p126
        $region58: #{tpu_custom_call.1} parent=43 // pred_check_branch
          %381 = sbr.rel (%p379) target = $region60
        $region59: #{tpu_custom_call.1} parent=43 // pred_region
          %382 = dma.done %s375, 8192
        $region60: #{tpu_custom_call.1} parent=43 // pred_fallthru
          _
        %s383 = sand.u32 %s32, 1
        %s384 = scalar_lea.sflag [#allocation10], %s383
        %s385 = sand.u32 %s139, 1
        %s386 = smul.addr %s385, 512
        %s387 = scalar_lea.vmem [#allocation11], %s386
        // Predicated region
        $region61: #{tpu_custom_call.1} parent=43 // pred_check
          %p388 = pneg %p152
        $region62: #{tpu_custom_call.1} parent=43 // pred_check_branch
          %390 = sbr.rel (%p388) target = $region64
        $region63: #{tpu_custom_call.1} parent=43 // pred_region
          %391 = dma.done %s384, 8192
        $region64: #{tpu_custom_call.1} parent=43 // pred_fallthru
          _
        %p392 = pneg %p48
        %p393 = pneg %p45
        %s394 = sand.u32 %s32, 1
        %s395 = scalar_lea.sflag [#allocation7], %s394
        %s396 = sand.u32 %s61, 1
        %s397 = smul.addr %s396, 8
        %s398 = scalar_lea.vmem [#allocation6], %s397
        %p399 = pneg %p74
        %p400 = pneg %p71
        %s401 = sand.u32 %s32, 1
        %s402 = scalar_lea.sflag [#allocation7], %s401
        %s403 = sand.u32 %s87, 1
        %s404 = smul.addr %s403, 8
        %s405 = scalar_lea.vmem [#allocation8], %s404
        %p406 = pneg %p100
        %p407 = pneg %p97
        %s408 = sand.u32 %s32, 1
        %s409 = scalar_lea.sflag [#allocation10], %s408
        %s410 = sand.u32 %s113, 1
        %s411 = smul.addr %s410, 512
        %s412 = scalar_lea.vmem [#allocation9], %s411
        %p413 = pneg %p126
        %p414 = pneg %p123
        %s415 = sand.u32 %s32, 1
        %s416 = scalar_lea.sflag [#allocation10], %s415
        %s417 = sand.u32 %s139, 1
        %s418 = smul.addr %s417, 512
        %s419 = scalar_lea.vmem [#allocation11], %s418
        %p420 = pneg %p152
        %p421 = pneg %p149
        %p422 = scmp.lt.s32.totalorder %s32, 1
        %s423 = scalar_select %p422, %s32, 1
        %s424 = smul.addr %s423, 4
        %s425 = scalar_lea.vmem %s5, %s424
        %p426 = pneg %p178
        %p427 = pneg %p175
        %p428 = pneg %p204
        %p429 = pneg %p201
        %s430 = sand.u32 %s191, 1
        %s431 = scalar_lea.sflag [#allocation5], %s430
        %s432 = sand.u32 %s191, 1
        %s433 = smul.addr %s432, 8
        %s434 = scalar_lea.vmem [#allocation12], %s433
        %p435 = pneg %p230
        %p436 = pneg %p227
        %s437 = sand.u32 %s217, 1
        %s438 = scalar_lea.sflag [#allocation14], %s437
        %s439 = sand.u32 %s217, 1
        %s440 = smul.addr %s439, 8
        %s441 = scalar_lea.vmem [#allocation13], %s440
        %p442 = scmp.lt.s32.totalorder %s32, 1
        %s443 = scalar_select %p442, %s32, 1
        %s444 = smul.addr %s443, 4
        %s445 = scalar_lea.vmem %s5, %s444
        %p446 = scmp.eq.s32.totalorder %s32, 0
        // Predicated region
        $region65: #{tpu_custom_call.1} parent=43 // pred_check
          %p447 = pneg %p446
        $region66: #{tpu_custom_call.1} parent=43 // pred_check_branch
          %449 = sbr.rel (%p447) target = $region68
        $region67: #{tpu_custom_call.1} parent=43 // pred_region
          %v450 = vld [vmem:[#allocation3] sm:$0xff]
          %451 = vst [vmem:[#allocation2] sm:$0xff] %v450
        $region68: #{tpu_custom_call.1} parent=43 // pred_fallthru
          _
        %v452 = vld [vmem:[#allocation2] sm:$0xff]
        %v453 = vld [vmem:[%s360] sm:$0xff]
        %v454 = vld [vmem:[%s369] sm:$0xff]
        %v455 = vld [vmem:[%s378] sm:$0xff]
        %v456 = vld [vmem:[%s378 + $0x8] sm:$0xff]
        %v457 = vld [vmem:[%s378 + $0x10] sm:$0xff]
        %v458 = vld [vmem:[%s378 + $0x18] sm:$0xff]
        %v459 = vld [vmem:[%s378 + $0x20] sm:$0xff]
        %v460 = vld [vmem:[%s378 + $0x28] sm:$0xff]
        %v461 = vld [vmem:[%s378 + $0x30] sm:$0xff]
        %v462 = vld [vmem:[%s378 + $0x38] sm:$0xff]
        %v463 = vld [vmem:[%s378 + $0x40] sm:$0xff]
        %v464 = vld [vmem:[%s378 + $0x48] sm:$0xff]
        %v465 = vld [vmem:[%s378 + $0x50] sm:$0xff]
        %v466 = vld [vmem:[%s378 + $0x58] sm:$0xff]
        %v467 = vld [vmem:[%s378 + $0x60] sm:$0xff]
        %v468 = vld [vmem:[%s378 + $0x68] sm:$0xff]
        %v469 = vld [vmem:[%s378 + $0x70] sm:$0xff]
        %v470 = vld [vmem:[%s378 + $0x78] sm:$0xff]
        %v471 = vld [vmem:[%s378 + $0x80] sm:$0xff]
        %v472 = vld [vmem:[%s378 + $0x88] sm:$0xff]
        %v473 = vld [vmem:[%s378 + $0x90] sm:$0xff]
        %v474 = vld [vmem:[%s378 + $0x98] sm:$0xff]
        %v475 = vld [vmem:[%s378 + $0xa0] sm:$0xff]
        %v476 = vld [vmem:[%s378 + $0xa8] sm:$0xff]
        %v477 = vld [vmem:[%s378 + $0xb0] sm:$0xff]
        %v478 = vld [vmem:[%s378 + $0xb8] sm:$0xff]
        %v479 = vld [vmem:[%s378 + $0xc0] sm:$0xff]
        %v480 = vld [vmem:[%s378 + $0xc8] sm:$0xff]
        %v481 = vld [vmem:[%s378 + $0xd0] sm:$0xff]
        %v482 = vld [vmem:[%s378 + $0xd8] sm:$0xff]
        %v483 = vld [vmem:[%s378 + $0xe0] sm:$0xff]
        %v484 = vld [vmem:[%s378 + $0xe8] sm:$0xff]
        %v485 = vld [vmem:[%s378 + $0xf0] sm:$0xff]
        %v486 = vld [vmem:[%s378 + $0xf8] sm:$0xff]
        %v487 = vld [vmem:[%s378 + $0x100] sm:$0xff]
        %v488 = vld [vmem:[%s378 + $0x108] sm:$0xff]
        %v489 = vld [vmem:[%s378 + $0x110] sm:$0xff]
        %v490 = vld [vmem:[%s378 + $0x118] sm:$0xff]
        %v491 = vld [vmem:[%s378 + $0x120] sm:$0xff]
        %v492 = vld [vmem:[%s378 + $0x128] sm:$0xff]
        %v493 = vld [vmem:[%s378 + $0x130] sm:$0xff]
        %v494 = vld [vmem:[%s378 + $0x138] sm:$0xff]
        %v495 = vld [vmem:[%s378 + $0x140] sm:$0xff]
        %v496 = vld [vmem:[%s378 + $0x148] sm:$0xff]
        %v497 = vld [vmem:[%s378 + $0x150] sm:$0xff]
        %v498 = vld [vmem:[%s378 + $0x158] sm:$0xff]
        %v499 = vld [vmem:[%s378 + $0x160] sm:$0xff]
        %v500 = vld [vmem:[%s378 + $0x168] sm:$0xff]
        %v501 = vld [vmem:[%s378 + $0x170] sm:$0xff]
        %v502 = vld [vmem:[%s378 + $0x178] sm:$0xff]
        %v503 = vld [vmem:[%s378 + $0x180] sm:$0xff]
        %v504 = vld [vmem:[%s378 + $0x188] sm:$0xff]
        %v505 = vld [vmem:[%s378 + $0x190] sm:$0xff]
        %v506 = vld [vmem:[%s378 + $0x198] sm:$0xff]
        %v507 = vld [vmem:[%s378 + $0x1a0] sm:$0xff]
        %v508 = vld [vmem:[%s378 + $0x1a8] sm:$0xff]
        %v509 = vld [vmem:[%s378 + $0x1b0] sm:$0xff]
        %v510 = vld [vmem:[%s378 + $0x1b8] sm:$0xff]
        %v511 = vld [vmem:[%s378 + $0x1c0] sm:$0xff]
        %v512 = vld [vmem:[%s378 + $0x1c8] sm:$0xff]
        %v513 = vld [vmem:[%s378 + $0x1d0] sm:$0xff]
        %v514 = vld [vmem:[%s378 + $0x1d8] sm:$0xff]
        %v515 = vld [vmem:[%s378 + $0x1e0] sm:$0xff]
        %v516 = vld [vmem:[%s378 + $0x1e8] sm:$0xff]
        %v517 = vld [vmem:[%s378 + $0x1f0] sm:$0xff]
        %v518 = vld [vmem:[%s378 + $0x1f8] sm:$0xff]
        %v519 = vld [vmem:[%s387] sm:$0xff]
        %v520 = vld [vmem:[%s387 + $0x8] sm:$0xff]
        %v521 = vld [vmem:[%s387 + $0x10] sm:$0xff]
        %v522 = vld [vmem:[%s387 + $0x18] sm:$0xff]
        %v523 = vld [vmem:[%s387 + $0x20] sm:$0xff]
        %v524 = vld [vmem:[%s387 + $0x28] sm:$0xff]
        %v525 = vld [vmem:[%s387 + $0x30] sm:$0xff]
        %v526 = vld [vmem:[%s387 + $0x38] sm:$0xff]
        %v527 = vld [vmem:[%s387 + $0x40] sm:$0xff]
        %v528 = vld [vmem:[%s387 + $0x48] sm:$0xff]
        %v529 = vld [vmem:[%s387 + $0x50] sm:$0xff]
        %v530 = vld [vmem:[%s387 + $0x58] sm:$0xff]
        %v531 = vld [vmem:[%s387 + $0x60] sm:$0xff]
        %v532 = vld [vmem:[%s387 + $0x68] sm:$0xff]
        %v533 = vld [vmem:[%s387 + $0x70] sm:$0xff]
        %v534 = vld [vmem:[%s387 + $0x78] sm:$0xff]
        %v535 = vld [vmem:[%s387 + $0x80] sm:$0xff]
        %v536 = vld [vmem:[%s387 + $0x88] sm:$0xff]
        %v537 = vld [vmem:[%s387 + $0x90] sm:$0xff]
        %v538 = vld [vmem:[%s387 + $0x98] sm:$0xff]
        %v539 = vld [vmem:[%s387 + $0xa0] sm:$0xff]
        %v540 = vld [vmem:[%s387 + $0xa8] sm:$0xff]
        %v541 = vld [vmem:[%s387 + $0xb0] sm:$0xff]
        %v542 = vld [vmem:[%s387 + $0xb8] sm:$0xff]
        %v543 = vld [vmem:[%s387 + $0xc0] sm:$0xff]
        %v544 = vld [vmem:[%s387 + $0xc8] sm:$0xff]
        %v545 = vld [vmem:[%s387 + $0xd0] sm:$0xff]
        %v546 = vld [vmem:[%s387 + $0xd8] sm:$0xff]
        %v547 = vld [vmem:[%s387 + $0xe0] sm:$0xff]
        %v548 = vld [vmem:[%s387 + $0xe8] sm:$0xff]
        %v549 = vld [vmem:[%s387 + $0xf0] sm:$0xff]
        %v550 = vld [vmem:[%s387 + $0xf8] sm:$0xff]
        %v551 = vld [vmem:[%s387 + $0x100] sm:$0xff]
        %v552 = vld [vmem:[%s387 + $0x108] sm:$0xff]
        %v553 = vld [vmem:[%s387 + $0x110] sm:$0xff]
        %v554 = vld [vmem:[%s387 + $0x118] sm:$0xff]
        %v555 = vld [vmem:[%s387 + $0x120] sm:$0xff]
        %v556 = vld [vmem:[%s387 + $0x128] sm:$0xff]
        %v557 = vld [vmem:[%s387 + $0x130] sm:$0xff]
        %v558 = vld [vmem:[%s387 + $0x138] sm:$0xff]
        %v559 = vld [vmem:[%s387 + $0x140] sm:$0xff]
        %v560 = vld [vmem:[%s387 + $0x148] sm:$0xff]
        %v561 = vld [vmem:[%s387 + $0x150] sm:$0xff]
        %v562 = vld [vmem:[%s387 + $0x158] sm:$0xff]
        %v563 = vld [vmem:[%s387 + $0x160] sm:$0xff]
        %v564 = vld [vmem:[%s387 + $0x168] sm:$0xff]
        %v565 = vld [vmem:[%s387 + $0x170] sm:$0xff]
        %v566 = vld [vmem:[%s387 + $0x178] sm:$0xff]
        %v567 = vld [vmem:[%s387 + $0x180] sm:$0xff]
        %v568 = vld [vmem:[%s387 + $0x188] sm:$0xff]
        %v569 = vld [vmem:[%s387 + $0x190] sm:$0xff]
        %v570 = vld [vmem:[%s387 + $0x198] sm:$0xff]
        %v571 = vld [vmem:[%s387 + $0x1a0] sm:$0xff]
        %v572 = vld [vmem:[%s387 + $0x1a8] sm:$0xff]
        %v573 = vld [vmem:[%s387 + $0x1b0] sm:$0xff]
        %v574 = vld [vmem:[%s387 + $0x1b8] sm:$0xff]
        %v575 = vld [vmem:[%s387 + $0x1c0] sm:$0xff]
        %v576 = vld [vmem:[%s387 + $0x1c8] sm:$0xff]
        %v577 = vld [vmem:[%s387 + $0x1d0] sm:$0xff]
        %v578 = vld [vmem:[%s387 + $0x1d8] sm:$0xff]
        %v579 = vld [vmem:[%s387 + $0x1e0] sm:$0xff]
        %v580 = vld [vmem:[%s387 + $0x1e8] sm:$0xff]
        %v581 = vld [vmem:[%s387 + $0x1f0] sm:$0xff]
        %v582 = vld [vmem:[%s387 + $0x1f8] sm:$0xff]
        %583 = vmatprep.subr.mxu0 %v580
        %584 = vmatpush1.msra.mxu0 %v579
        %585 = vmatprep.subr.mxu0 %v576
        %586 = vmatpush1.msra.mxu0 %v575
        %587 = vmatprep.subr.mxu0 %v572
        %588 = vmatpush1.msra.mxu0 %v571
        %589 = vmatprep.subr.mxu0 %v568
        %590 = vmatpush1.msra.mxu0 %v567
        %591 = vmatprep.subr.mxu0 %v564
        %592 = vmatpush1.msra.mxu0 %v563
        %593 = vmatprep.subr.mxu0 %v560
        %594 = vmatpush1.msra.mxu0 %v559
        %595 = vmatprep.subr.mxu0 %v556
        %596 = vmatpush1.msra.mxu0 %v555
        %597 = vmatprep.subr.mxu0 %v552
        %598 = vmatpush1.msra.mxu0 %v551
        %599 = vmatprep.subr.mxu0 %v548
        %600 = vmatpush1.msra.mxu0 %v547
        %601 = vmatprep.subr.mxu0 %v544
        %602 = vmatpush1.msra.mxu0 %v543
        %603 = vmatprep.subr.mxu0 %v540
        %604 = vmatpush1.msra.mxu0 %v539
        %605 = vmatprep.subr.mxu0 %v536
        %606 = vmatpush1.msra.mxu0 %v535
        %607 = vmatprep.subr.mxu0 %v532
        %608 = vmatpush1.msra.mxu0 %v531
        %609 = vmatprep.subr.mxu0 %v528
        %610 = vmatpush1.msra.mxu0 %v527
        %611 = vmatprep.subr.mxu0 %v524
        %612 = vmatpush1.msra.mxu0 %v523
        %613 = vmatprep.subr.mxu0 %v520
        %614 = vmatpush1.msra.mxu0 %v519
        %615 = vmatprep.subr.mxu0 0.0
        %616 = vmatpush2.msra.mxu0 0.0
        %617 = vmatprep.subr.mxu0 0.0
        %618 = vmatpush2.msra.mxu0 0.0
        %619 = vmatprep.subr.mxu0 0.0
        %620 = vmatpush2.msra.mxu0 0.0
        %621 = vmatprep.subr.mxu0 0.0
        %622 = vmatpush2.msra.mxu0 0.0
        %623 = vmatprep.subr.mxu0 0.0
        %624 = vmatpush2.msra.mxu0 0.0
        %625 = vmatprep.subr.mxu0 0.0
        %626 = vmatpush2.msra.mxu0 0.0
        %627 = vmatprep.subr.mxu0 0.0
        %628 = vmatpush2.msra.mxu0 0.0
        %629 = vmatprep.subr.mxu0 0.0
        %630 = vmatpush2.msra.mxu0 0.0
        %631 = vmatprep.subr.mxu0 0.0
        %632 = vmatpush2.msra.mxu0 0.0
        %633 = vmatprep.subr.mxu0 0.0
        %634 = vmatpush2.msra.mxu0 0.0
        %635 = vmatprep.subr.mxu0 0.0
        %636 = vmatpush2.msra.mxu0 0.0
        %637 = vmatprep.subr.mxu0 0.0
        %638 = vmatpush2.msra.mxu0 0.0
        %639 = vmatprep.subr.mxu0 0.0
        %640 = vmatpush2.msra.mxu0 0.0
        %641 = vmatprep.subr.mxu0 0.0
        %642 = vmatpush2.msra.mxu0 0.0
        %643 = vmatprep.subr.mxu0 0.0
        %644 = vmatpush2.msra.mxu0 0.0
        %645 = vmatprep.subr.mxu0 0.0
        %646 = vmatpush2.msra.mxu0 0.0
        %647 = vmatprep.mubr.f32.mxu0 0.0
        %648 = vmatmul.mubr.f32.gmra.mxu0 %v453
        %v649 = vpop.f32.mrf.mxu0
        %v650 = vadd.f32 0.0, %v649
        %v651 = vpop.f32.mrf.mxu0
        %v652 = vadd.f32 0.0, %v651
        %653 = vdwg.mxu0
        %654 = vmatprep.subr.mxu0 %v582
        %655 = vmatpush1.msra.mxu0 %v581
        %656 = vmatprep.subr.mxu0 %v578
        %657 = vmatpush1.msra.mxu0 %v577
        %658 = vmatprep.subr.mxu0 %v574
        %659 = vmatpush1.msra.mxu0 %v573
        %660 = vmatprep.subr.mxu0 %v570
        %661 = vmatpush1.msra.mxu0 %v569
        %662 = vmatprep.subr.mxu0 %v566
        %663 = vmatpush1.msra.mxu0 %v565
        %664 = vmatprep.subr.mxu0 %v562
        %665 = vmatpush1.msra.mxu0 %v561
        %666 = vmatprep.subr.mxu0 %v558
        %667 = vmatpush1.msra.mxu0 %v557
        %668 = vmatprep.subr.mxu0 %v554
        %669 = vmatpush1.msra.mxu0 %v553
        %670 = vmatprep.subr.mxu0 %v550
        %671 = vmatpush1.msra.mxu0 %v549
        %672 = vmatprep.subr.mxu0 %v546
        %673 = vmatpush1.msra.mxu0 %v545
        %674 = vmatprep.subr.mxu0 %v542
        %675 = vmatpush1.msra.mxu0 %v541
        %676 = vmatprep.subr.mxu0 %v538
        %677 = vmatpush1.msra.mxu0 %v537
        %678 = vmatprep.subr.mxu0 %v534
        %679 = vmatpush1.msra.mxu0 %v533
        %680 = vmatprep.subr.mxu0 %v530
        %681 = vmatpush1.msra.mxu0 %v529
        %682 = vmatprep.subr.mxu0 %v526
        %683 = vmatpush1.msra.mxu0 %v525
        %684 = vmatprep.subr.mxu0 %v522
        %685 = vmatpush1.msra.mxu0 %v521
        %686 = vmatprep.subr.mxu0 0.0
        %687 = vmatpush2.msra.mxu0 0.0
        %688 = vmatprep.subr.mxu0 0.0
        %689 = vmatpush2.msra.mxu0 0.0
        %690 = vmatprep.subr.mxu0 0.0
        %691 = vmatpush2.msra.mxu0 0.0
        %692 = vmatprep.subr.mxu0 0.0
        %693 = vmatpush2.msra.mxu0 0.0
        %694 = vmatprep.subr.mxu0 0.0
        %695 = vmatpush2.msra.mxu0 0.0
        %696 = vmatprep.subr.mxu0 0.0
        %697 = vmatpush2.msra.mxu0 0.0
        %698 = vmatprep.subr.mxu0 0.0
        %699 = vmatpush2.msra.mxu0 0.0
        %700 = vmatprep.subr.mxu0 0.0
        %701 = vmatpush2.msra.mxu0 0.0
        %702 = vmatprep.subr.mxu0 0.0
        %703 = vmatpush2.msra.mxu0 0.0
        %704 = vmatprep.subr.mxu0 0.0
        %705 = vmatpush2.msra.mxu0 0.0
        %706 = vmatprep.subr.mxu0 0.0
        %707 = vmatpush2.msra.mxu0 0.0
        %708 = vmatprep.subr.mxu0 0.0
        %709 = vmatpush2.msra.mxu0 0.0
        %710 = vmatprep.subr.mxu0 0.0
        %711 = vmatpush2.msra.mxu0 0.0
        %712 = vmatprep.subr.mxu0 0.0
        %713 = vmatpush2.msra.mxu0 0.0
        %714 = vmatprep.subr.mxu0 0.0
        %715 = vmatpush2.msra.mxu0 0.0
        %716 = vmatprep.subr.mxu0 0.0
        %717 = vmatpush2.msra.mxu0 0.0
        %718 = vmatprep.mubr.f32.mxu0 0.0
        %719 = vmatmul.mubr.f32.gmra.mxu0 %v453
        %v720 = vpop.f32.mrf.mxu0
        %v721 = vadd.f32 0.0, %v720
        %v722 = vpop.f32.mrf.mxu0
        %v723 = vadd.f32 0.0, %v722
        %724 = vdwg.mxu0
        %725 = vmatprep.subr.mxu0 %v516
        %726 = vmatpush1.msra.mxu0 %v515
        %727 = vmatprep.subr.mxu0 %v512
        %728 = vmatpush1.msra.mxu0 %v511
        %729 = vmatprep.subr.mxu0 %v508
        %730 = vmatpush1.msra.mxu0 %v507
        %731 = vmatprep.subr.mxu0 %v504
        %732 = vmatpush1.msra.mxu0 %v503
        %733 = vmatprep.subr.mxu0 %v500
        %734 = vmatpush1.msra.mxu0 %v499
        %735 = vmatprep.subr.mxu0 %v496
        %736 = vmatpush1.msra.mxu0 %v495
        %737 = vmatprep.subr.mxu0 %v492
        %738 = vmatpush1.msra.mxu0 %v491
        %739 = vmatprep.subr.mxu0 %v488
        %740 = vmatpush1.msra.mxu0 %v487
        %741 = vmatprep.subr.mxu0 %v484
        %742 = vmatpush1.msra.mxu0 %v483
        %743 = vmatprep.subr.mxu0 %v480
        %744 = vmatpush1.msra.mxu0 %v479
        %745 = vmatprep.subr.mxu0 %v476
        %746 = vmatpush1.msra.mxu0 %v475
        %747 = vmatprep.subr.mxu0 %v472
        %748 = vmatpush1.msra.mxu0 %v471
        %749 = vmatprep.subr.mxu0 %v468
        %750 = vmatpush1.msra.mxu0 %v467
        %751 = vmatprep.subr.mxu0 %v464
        %752 = vmatpush1.msra.mxu0 %v463
        %753 = vmatprep.subr.mxu0 %v460
        %754 = vmatpush1.msra.mxu0 %v459
        %755 = vmatprep.subr.mxu0 %v456
        %756 = vmatpush1.msra.mxu0 %v455
        %757 = vmatprep.subr.mxu0 0.0
        %758 = vmatpush2.msra.mxu0 0.0
        %759 = vmatprep.subr.mxu0 0.0
        %760 = vmatpush2.msra.mxu0 0.0
        %761 = vmatprep.subr.mxu0 0.0
        %762 = vmatpush2.msra.mxu0 0.0
        %763 = vmatprep.subr.mxu0 0.0
        %764 = vmatpush2.msra.mxu0 0.0
        %765 = vmatprep.subr.mxu0 0.0
        %766 = vmatpush2.msra.mxu0 0.0
        %767 = vmatprep.subr.mxu0 0.0
        %768 = vmatpush2.msra.mxu0 0.0
        %769 = vmatprep.subr.mxu0 0.0
        %770 = vmatpush2.msra.mxu0 0.0
        %771 = vmatprep.subr.mxu0 0.0
        %772 = vmatpush2.msra.mxu0 0.0
        %773 = vmatprep.subr.mxu0 0.0
        %774 = vmatpush2.msra.mxu0 0.0
        %775 = vmatprep.subr.mxu0 0.0
        %776 = vmatpush2.msra.mxu0 0.0
        %777 = vmatprep.subr.mxu0 0.0
        %778 = vmatpush2.msra.mxu0 0.0
        %779 = vmatprep.subr.mxu0 0.0
        %780 = vmatpush2.msra.mxu0 0.0
        %781 = vmatprep.subr.mxu0 0.0
        %782 = vmatpush2.msra.mxu0 0.0
        %783 = vmatprep.subr.mxu0 0.0
        %784 = vmatpush2.msra.mxu0 0.0
        %785 = vmatprep.subr.mxu0 0.0
        %786 = vmatpush2.msra.mxu0 0.0
        %787 = vmatprep.subr.mxu0 0.0
        %788 = vmatpush2.msra.mxu0 0.0
        %789 = vmatprep.mubr.f32.mxu0 0.0
        %790 = vmatmul.mubr.f32.gmra.mxu0 %v452
        %v791 = vpop.f32.mrf.mxu0
        %v792 = vadd.f32 %v650, %v791
        %v793 = vpop.f32.mrf.mxu0
        %v794 = vadd.f32 %v652, %v793
        %795 = vdwg.mxu0
        %796 = vmatprep.subr.mxu0 %v518
        %797 = vmatpush1.msra.mxu0 %v517
        %798 = vmatprep.subr.mxu0 %v514
        %799 = vmatpush1.msra.mxu0 %v513
        %800 = vmatprep.subr.mxu0 %v510
        %801 = vmatpush1.msra.mxu0 %v509
        %802 = vmatprep.subr.mxu0 %v506
        %803 = vmatpush1.msra.mxu0 %v505
        %804 = vmatprep.subr.mxu0 %v502
        %805 = vmatpush1.msra.mxu0 %v501
        %806 = vmatprep.subr.mxu0 %v498
        %807 = vmatpush1.msra.mxu0 %v497
        %808 = vmatprep.subr.mxu0 %v494
        %809 = vmatpush1.msra.mxu0 %v493
        %810 = vmatprep.subr.mxu0 %v490
        %811 = vmatpush1.msra.mxu0 %v489
        %812 = vmatprep.subr.mxu0 %v486
        %813 = vmatpush1.msra.mxu0 %v485
        %814 = vmatprep.subr.mxu0 %v482
        %815 = vmatpush1.msra.mxu0 %v481
        %816 = vmatprep.subr.mxu0 %v478
        %817 = vmatpush1.msra.mxu0 %v477
        %818 = vmatprep.subr.mxu0 %v474
        %819 = vmatpush1.msra.mxu0 %v473
        %820 = vmatprep.subr.mxu0 %v470
        %821 = vmatpush1.msra.mxu0 %v469
        %822 = vmatprep.subr.mxu0 %v466
        %823 = vmatpush1.msra.mxu0 %v465
        %824 = vmatprep.subr.mxu0 %v462
        %825 = vmatpush1.msra.mxu0 %v461
        %826 = vmatprep.subr.mxu0 %v458
        %827 = vmatpush1.msra.mxu0 %v457
        %828 = vmatprep.subr.mxu0 0.0
        %829 = vmatpush2.msra.mxu0 0.0
        %830 = vmatprep.subr.mxu0 0.0
        %831 = vmatpush2.msra.mxu0 0.0
        %832 = vmatprep.subr.mxu0 0.0
        %833 = vmatpush2.msra.mxu0 0.0
        %834 = vmatprep.subr.mxu0 0.0
        %835 = vmatpush2.msra.mxu0 0.0
        %836 = vmatprep.subr.mxu0 0.0
        %837 = vmatpush2.msra.mxu0 0.0
        %838 = vmatprep.subr.mxu0 0.0
        %839 = vmatpush2.msra.mxu0 0.0
        %840 = vmatprep.subr.mxu0 0.0
        %841 = vmatpush2.msra.mxu0 0.0
        %842 = vmatprep.subr.mxu0 0.0
        %843 = vmatpush2.msra.mxu0 0.0
        %844 = vmatprep.subr.mxu0 0.0
        %845 = vmatpush2.msra.mxu0 0.0
        %846 = vmatprep.subr.mxu0 0.0
        %847 = vmatpush2.msra.mxu0 0.0
        %848 = vmatprep.subr.mxu0 0.0
        %849 = vmatpush2.msra.mxu0 0.0
        %850 = vmatprep.subr.mxu0 0.0
        %851 = vmatpush2.msra.mxu0 0.0
        %852 = vmatprep.subr.mxu0 0.0
        %853 = vmatpush2.msra.mxu0 0.0
        %854 = vmatprep.subr.mxu0 0.0
        %855 = vmatpush2.msra.mxu0 0.0
        %856 = vmatprep.subr.mxu0 0.0
        %857 = vmatpush2.msra.mxu0 0.0
        %858 = vmatprep.subr.mxu0 0.0
        %859 = vmatpush2.msra.mxu0 0.0
        %860 = vmatprep.mubr.f32.mxu0 0.0
        %861 = vmatmul.mubr.f32.gmra.mxu0 %v452
        %v862 = vpop.f32.mrf.mxu0
        %v863 = vadd.f32 %v721, %v862
        %v864 = vpop.f32.mrf.mxu0
        %v865 = vadd.f32 %v723, %v864
        %866 = vdwg.mxu0
        %v867 = vld [vmem:[%s445] sm:$0xf]
        %v869 = vlaneseq
        %v870 = vshrl.u32 %v869, 7
        %v871 = vsub.s32 0, %v870
        %v872 = vrot.slane %v867, %v871
        %v873 = vlaneseq
        %v874 = vshrl.u32 %v873, 7
        %v875 = vsub.s32 1, %v874
        %v876 = vrot.slane %v867, %v875
        %v877 = vlaneseq
        %v878 = vshrl.u32 %v877, 7
        %v879 = vsub.s32 2, %v878
        %v880 = vrot.slane %v867, %v879
        %v881 = vlaneseq
        %v882 = vshrl.u32 %v881, 7
        %v883 = vsub.s32 3, %v882
        %v884 = vrot.slane %v867, %v883
        %v889 = vadd.f32 %v792, %v872
        %v890 = vadd.f32 %v794, %v876
        %v891 = vadd.f32 %v863, %v880
        %v892 = vadd.f32 %v865, %v884
        %v893 = vxor.u32 %v889, 2147483648
        %v894 = vmul.f32 %v893, 1.442695
        %v895 = vpow.pop %v894
        %v896 = vadd.f32 %v895, 1.0
        %v897 = vrcp.pop %v896
        %v898 = vmul.f32 1.0, %v897
        %v899 = vxor.u32 %v890, 2147483648
        %v900 = vmul.f32 %v899, 1.442695
        %v901 = vpow.pop %v900
        %v902 = vadd.f32 %v901, 1.0
        %v903 = vrcp.pop %v902
        %v904 = vmul.f32 1.0, %v903
        %v905 = vtanh.pop %v891
        %v906 = vxor.u32 %v892, 2147483648
        %v907 = vmul.f32 %v906, 1.442695
        %v908 = vpow.pop %v907
        %v909 = vadd.f32 %v908, 1.0
        %v910 = vrcp.pop %v909
        %v911 = vmul.f32 1.0, %v910
        %v912 = vmul.f32 %v904, %v454
        %v913 = vmul.f32 %v898, %v905
        %v914 = vadd.f32 %v912, %v913
        %v915 = vtanh.pop %v914
        %v916 = vmul.f32 %v911, %v915
        %917 = vst [vmem:[%s434] sm:$0xff] %v916
        %918 = vst [vmem:[%s441] sm:$0xff] %v914
        %s919 = sadd.s32 %s32, 1
        %p920 = scmp.lt.s32.totalorder %s919, 2
        // Predicated region
        $region69: #{tpu_custom_call.1} parent=43 // pred_check
          %p921 = pneg %p920
        $region70: #{tpu_custom_call.1} parent=43 // pred_check_branch
          %923 = sbr.rel (%p921) target = $region72
        $region71: #{tpu_custom_call.1} parent=43 // pred_region
          %924 = vst [vmem:[#allocation2] sm:$0xff] %v916
        $region72: #{tpu_custom_call.1} parent=43 // pred_fallthru
          _
        %s925 = sand.u32 %s191, 1
        %s926 = scalar_lea.sflag [#allocation5], %s925
        %s927 = sand.u32 %s191, 1
        %s928 = smul.addr %s927, 8
        %s929 = scalar_lea.vmem [#allocation12], %s928
        %s930 = sand.u32 %s217, 1
        %s931 = scalar_lea.sflag [#allocation14], %s930
        %s932 = sand.u32 %s217, 1
        %s933 = smul.addr %s932, 8
        %s934 = scalar_lea.vmem [#allocation13], %s933
        // Predicated region
        $region73: #{tpu_custom_call.1} parent=43 // pred_check
          %p935 = pneg %p201
        $region74: #{tpu_custom_call.1} parent=43 // pred_check_branch
          %937 = sbr.rel (%p935) target = $region76
        $region75: #{tpu_custom_call.1} parent=43 // pred_region
          %s939 = ssub.s32 128, 128
          %940 = vsyncadd %s926, %s939
          %s941 = smul.addr %s32, 128
          %s942 = scalar_lea.hbm %s6, %s941
          %s944 = sshll.u32 %s929, 4
          %s945 = int_to_ptr.vmem [resolvable:$true] %s944
          %947 = dma.vmem_to_hbm [thread:$0]  %s945, 128, %s942, %s926
        $region76: #{tpu_custom_call.1} parent=43 // pred_fallthru
          _
        // Predicated region
        $region77: #{tpu_custom_call.1} parent=43 // pred_check
          %p948 = pneg %p227
        $region78: #{tpu_custom_call.1} parent=43 // pred_check_branch
          %950 = sbr.rel (%p948) target = $region80
        $region79: #{tpu_custom_call.1} parent=43 // pred_region
          %s952 = ssub.s32 128, 128
          %953 = vsyncadd %s931, %s952
          %s954 = smul.addr %s32, 128
          %s955 = scalar_lea.hbm %s7, %s954
          %s957 = sshll.u32 %s934, 4
          %s958 = int_to_ptr.vmem [resolvable:$true] %s957
          %960 = dma.vmem_to_hbm [thread:$0]  %s958, 128, %s955, %s931
        $region80: #{tpu_custom_call.1} parent=43 // pred_fallthru
          _
      $region44: #{tpu_custom_call.1} parent=5 // pred_fallthru
        _
      %p961 = scmp.le.s32.totalorder 2, %s27
      // Predicated region
      $region81: #{tpu_custom_call.1} parent=5 // pred_check
        %p962 = pneg %p961
      $region82: #{tpu_custom_call.1} parent=5 // pred_check_branch
        %964 = sbr.rel (%p962) target = $region84
      $region83: #{tpu_custom_call.1} parent=5 // pred_region
        %s965 = ssub.s32 %s27, 2
        // Predicated region
        $region85: #{tpu_custom_call.1} parent=83 // pred_check
          %p966 = pneg %p207
        $region86: #{tpu_custom_call.1} parent=83 // pred_check_branch
          %968 = sbr.rel (%p966) target = $region88
        $region87: #{tpu_custom_call.1} parent=83 // pred_region
          %s969 = sand.u32 %s192, 1
          %s970 = scalar_lea.sflag [#allocation5], %s969
          %s971 = sand.u32 %s192, 1
          %s972 = smul.addr %s971, 8
          %s973 = scalar_lea.vmem [#allocation12], %s972
          %974 = dma.done %s970, 128
        $region88: #{tpu_custom_call.1} parent=83 // pred_fallthru
          _
        // Predicated region
        $region89: #{tpu_custom_call.1} parent=83 // pred_check
          %p975 = pneg %p233
        $region90: #{tpu_custom_call.1} parent=83 // pred_check_branch
          %977 = sbr.rel (%p975) target = $region92
        $region91: #{tpu_custom_call.1} parent=83 // pred_region
          %s978 = sand.u32 %s218, 1
          %s979 = scalar_lea.sflag [#allocation14], %s978
          %s980 = sand.u32 %s218, 1
          %s981 = smul.addr %s980, 8
          %s982 = scalar_lea.vmem [#allocation13], %s981
          %983 = dma.done %s979, 128
        $region92: #{tpu_custom_call.1} parent=83 // pred_fallthru
          _
      $region84: #{tpu_custom_call.1} parent=5 // pred_fallthru
        _
    $region6: #{tpu_custom_call.1} parent=1 // loop_footer
      %s31 = sadd.s32 1, %s27
    $region7: #{tpu_custom_call.1} parent=1 // loop_footer_branch
      %26 = sbr.rel target = $region3
    $region8: #{tpu_custom_call.1} parent=1 // loop_exit
      _
    %984 = vsyncpa [#allocation4], 1
    %s985 = scalar_lea.sflag [#allocation4], 1
    %986 = vsyncpa %s985, 1
    %987 = vsyncpa [#allocation7], 1
    %s988 = scalar_lea.sflag [#allocation7], 1
    %989 = vsyncpa %s988, 1
    %990 = vsyncpa [#allocation10], 1
    %s991 = scalar_lea.sflag [#allocation10], 1
    %992 = vsyncpa %s991, 1
    %993 = vsyncpa [#allocation5], 1
    %s994 = scalar_lea.sflag [#allocation5], 1
    %995 = vsyncpa %s994, 1
    %996 = vsyncpa [#allocation14], 1
    %s997 = scalar_lea.sflag [#allocation14], 1
    %998 = vsyncpa %s997, 1

</llo_original>
